<compile_context>
chip_gen: v7x
topology: tpu7x:2x2x1
jax: 0.10.0
libtpu: 0.0.40
codegen_flags: <defaults>
</compile_context>

<pallas_src>
import jax
import jax.numpy as jnp
from jax.experimental import pallas as pl
from jax.experimental.pallas import tpu as pltpu


# ----------------------------------------------------------------------------
# Kernel A: fused SequenceWise(BatchNorm1d) + LSTM input projection (big GEMM).
#   gates_x[m, :] = (x[m, :] * scale + shift) @ W_ih^T + (b_ih + b_hh)
# ----------------------------------------------------------------------------
def _bn_input_proj_kernel(x_ref, scale_ref, shift_ref, w_ref, b_ref, o_ref):
    # x_ref:    (TM, H_in)  input dtype
    # scale/shift: (1, H_in) f32   (folded eval-mode BatchNorm)
    # w_ref:    (H_in, 4H)  compute dtype (W_ih^T), VMEM-resident
    # b_ref:    (1, 4H)     f32 (b_ih + b_hh)
    # o_ref:    (TM, 4H)    f32
    x = x_ref[...].astype(jnp.float32)
    xb = x * scale_ref[...] + shift_ref[...]
    acc = jnp.dot(xb.astype(w_ref.dtype), w_ref[...],
                  preferred_element_type=jnp.float32)
    o_ref[...] = acc + b_ref[...]


def bn_input_projection(x2d, scale, shift, w_ih_t, bias, *,
                        compute_dtype=jnp.bfloat16, tm=512):
    """Tiled (T*N, H_in) @ (H_in, 4H) GEMM with fused BatchNorm, f32 output."""
    m, h_in = x2d.shape
    g4 = w_ih_t.shape[1]
    # TM: multiple of 256 (good MXU fill on v6e/v7x, fine on v5e) when M is big;
    # fall back to the full (small) M so the block equals the array dims.
    tm = min(tm, m)
    grid_m = pl.cdiv(m, tm)

    w_c = w_ih_t.astype(compute_dtype)
    itm = jnp.dtype(x2d.dtype).itemsize
    itw = jnp.dtype(compute_dtype).itemsize
    cost = pl.CostEstimate(
        flops=2 * m * h_in * g4,
        transcendentals=0,
        bytes_accessed=int(m * h_in * itm + h_in * g4 * itw
                           + 2 * h_in * 4 + g4 * 4 + m * g4 * 4),
    )

    return pl.pallas_call(
        _bn_input_proj_kernel,
        out_shape=jax.ShapeDtypeStruct((m, g4), jnp.float32),
        grid=(grid_m,),
        in_specs=[
            pl.BlockSpec((tm, h_in), lambda i: (i, 0)),   # streamed row tile
            pl.BlockSpec((1, h_in), lambda i: (0, 0)),    # BN scale   (resident)
            pl.BlockSpec((1, h_in), lambda i: (0, 0)),    # BN shift   (resident)
            pl.BlockSpec((h_in, g4), lambda i: (0, 0)),   # W_ih^T     (resident)
            pl.BlockSpec((1, g4), lambda i: (0, 0)),      # bias       (resident)
        ],
        out_specs=pl.BlockSpec((tm, g4), lambda i: (i, 0)),
        compiler_params=pltpu.CompilerParams(
            dimension_semantics=("parallel",),            # megacore on v7x
            vmem_limit_bytes=48 * 1024 * 1024,            # >32MiB default, <64MiB v7x
        ),
        cost_estimate=cost,
    )(x2d, scale, shift, w_c, bias)


# ----------------------------------------------------------------------------
# Kernel B: sequential LSTM recurrence over T with packed-sequence masking.
# h, c persist across grid steps in VMEM scratch.
# ----------------------------------------------------------------------------
def _lstm_recurrence_kernel(gates_x_ref, w_hh_ref, len_ref, o_ref, h_scr, c_scr):
    t = pl.program_id(0)
    _, hidden = h_scr.shape

    @pl.when(t == 0)
    def _():
        h_scr[...] = jnp.zeros_like(h_scr)
        c_scr[...] = jnp.zeros_like(c_scr)

    h = h_scr[...]
    c = c_scr[...]

    # gates = x_t W_ih^T + b_ih + b_hh (precomputed)  +  h_{t-1} W_hh^T
    gates = gates_x_ref[0] + jnp.dot(
        h.astype(w_hh_ref.dtype), w_hh_ref[...],
        preferred_element_type=jnp.float32)

    i_g = jax.nn.sigmoid(gates[:, 0 * hidden:1 * hidden])
    f_g = jax.nn.sigmoid(gates[:, 1 * hidden:2 * hidden])
    g_g = jnp.tanh(gates[:, 2 * hidden:3 * hidden])
    o_g = jax.nn.sigmoid(gates[:, 3 * hidden:4 * hidden])

    c_new = f_g * c + i_g * g_g
    h_new = o_g * jnp.tanh(c_new)

    valid = len_ref[...] > t                      # (N, 1) bool
    # Packed-sequence semantics: freeze state past each sequence's length...
    h_scr[...] = jnp.where(valid, h_new, h)
    c_scr[...] = jnp.where(valid, c_new, c)
    # ...and pad_packed_sequence zero-pads outputs past the length.
    o_ref[0] = jnp.where(valid, h_new, 0.0).astype(o_ref.dtype)


def lstm_recurrence(gates_x, w_hh_t, lengths, *, out_dtype,
                    compute_dtype=jnp.bfloat16):
    t_len, n, g4 = gates_x.shape
    hidden = g4 // 4
    len_col = lengths.astype(jnp.int32).reshape(n, 1)

    return pl.pallas_call(
        _lstm_recurrence_kernel,
        out_shape=jax.ShapeDtypeStruct((t_len, n, hidden), out_dtype),
        grid=(t_len,),
        in_specs=[
            pl.BlockSpec((1, n, g4), lambda t: (t, 0, 0)),   # per-step gates (pipelined)
            pl.BlockSpec((hidden, g4), lambda t: (0, 0)),    # W_hh^T (resident)
            pl.BlockSpec((n, 1), lambda t: (0, 0)),          # lengths (resident)
        ],
        out_specs=pl.BlockSpec((1, n, hidden), lambda t: (t, 0, 0)),
        scratch_shapes=[
            pltpu.VMEM((n, hidden), jnp.float32),            # h state
            pltpu.VMEM((n, hidden), jnp.float32),            # c state
        ],
        compiler_params=pltpu.CompilerParams(
            dimension_semantics=("arbitrary",),              # sequential recurrence
            vmem_limit_bytes=48 * 1024 * 1024,
        ),
    )(gates_x, w_hh_t.astype(compute_dtype), len_col)


# ----------------------------------------------------------------------------
# BatchRNN.forward wrapper (batch_norm=True, unidirectional LSTM, inference).
# ----------------------------------------------------------------------------
def batch_rnn_forward(x, output_lengths, params, *, eps=1e-5,
                      compute_dtype=jnp.bfloat16, tm=512):
    """x: (T, N, input_size) time-major; output_lengths: (N,) int; returns (T, N, hidden)."""
    t, n, h_in = x.shape
    hidden = params["w_hh"].shape[1]
    g4 = 4 * hidden

    # Fold eval-mode BatchNorm1d into per-feature scale/shift (parameter prep).
    inv_std = jax.lax.rsqrt(params["bn_var"].astype(jnp.float32) + eps)
    scale = (params["bn_gamma"].astype(jnp.float32) * inv_std).reshape(1, h_in)
    shift = (params["bn_beta"].astype(jnp.float32)
             - params["bn_mean"].astype(jnp.float32) * scale[0]).reshape(1, h_in)
    bias = (params["b_ih"].astype(jnp.float32)
            + params["b_hh"].astype(jnp.float32)).reshape(1, g4)

    x2d = x.reshape(t * n, h_in)                       # SequenceWise collapse (glue)
    gates_x = bn_input_projection(
        x2d, scale, shift, jnp.transpose(params["w_ih"]), bias,
        compute_dtype=compute_dtype, tm=tm)
    gates_x = gates_x.reshape(t, n, g4)                # view back per timestep (glue)

    return lstm_recurrence(gates_x, jnp.transpose(params["w_hh"]),
                           output_lengths, out_dtype=x.dtype,
                           compute_dtype=compute_dtype)


# ----------------------------------------------------------------------------
# Pure-JAX reference (f32) of the same forward semantics.
# ----------------------------------------------------------------------------
def reference_batch_rnn(x, lengths, params, eps=1e-5):
    t, n, _ = x.shape
    hidden = params["w_hh"].shape[1]
    inv_std = 1.0 / jnp.sqrt(params["bn_var"] + eps)
    xb = (x - params["bn_mean"]) * inv_std * params["bn_gamma"] + params["bn_beta"]
    b = params["b_ih"] + params["b_hh"]
    h = jnp.zeros((n, hidden), jnp.float32)
    c = jnp.zeros((n, hidden), jnp.float32)
    outs = []
    for step in range(t):
        gates = xb[step] @ params["w_ih"].T + h @ params["w_hh"].T + b
        i = jax.nn.sigmoid(gates[:, 0 * hidden:1 * hidden])
        f = jax.nn.sigmoid(gates[:, 1 * hidden:2 * hidden])
        g = jnp.tanh(gates[:, 2 * hidden:3 * hidden])
        o = jax.nn.sigmoid(gates[:, 3 * hidden:4 * hidden])
        c_new = f * c + i * g
        h_new = o * jnp.tanh(c_new)
        valid = (lengths > step)[:, None]
        h = jnp.where(valid, h_new, h)
        c = jnp.where(valid, c_new, c)
        outs.append(jnp.where(valid, h_new, 0.0))
    return jnp.stack(outs, axis=0)


if __name__ == "__main__":
    # Small shapes: T (time), N (batch), input_size, hidden_size.
    T, N, H_IN, HID = 8, 4, 32, 32

    key = jax.random.PRNGKey(0)
    ks = jax.random.split(key, 9)

    x = jax.random.normal(ks[0], (T, N, H_IN), dtype=jnp.float32)
    output_lengths = jnp.array([8, 6, 5, 3], dtype=jnp.int32)

    params = dict(
        bn_gamma=1.0 + 0.1 * jax.random.normal(ks[1], (H_IN,), jnp.float32),
        bn_beta=0.1 * jax.random.normal(ks[2], (H_IN,), jnp.float32),
        bn_mean=0.1 * jax.random.normal(ks[3], (H_IN,), jnp.float32),
        bn_var=jnp.abs(1.0 + 0.1 * jax.random.normal(ks[4], (H_IN,), jnp.float32)),
        w_ih=0.3 * jax.random.normal(ks[5], (4 * HID, H_IN), jnp.float32),  # PyTorch layout
        w_hh=0.3 * jax.random.normal(ks[6], (4 * HID, HID), jnp.float32),
        b_ih=0.1 * jax.random.normal(ks[7], (4 * HID,), jnp.float32),
        b_hh=0.1 * jax.random.normal(ks[8], (4 * HID,), jnp.float32),
    )

    y_ref = reference_batch_rnn(x, output_lengths, params)

    # f32 compute path: checks kernel logic (gate order, masking, BN fold).
    y_f32 = jax.block_until_ready(
        batch_rnn_forward(x, output_lengths, params, compute_dtype=jnp.float32))
    assert y_f32.shape == (T, N, HID)
    assert jnp.allclose(y_f32, y_ref, atol=2e-2, rtol=2e-2), (
        "f32 path mismatch, max abs diff=%e" % float(jnp.max(jnp.abs(y_f32 - y_ref))))

    # bf16 compute path (MXU-optimized default): loose numerical check.
    y_bf16 = jax.block_until_ready(
        batch_rnn_forward(x, output_lengths, params, compute_dtype=jnp.bfloat16))
    assert y_bf16.shape == (T, N, HID)
    assert jnp.allclose(y_bf16, y_ref, atol=5e-2, rtol=5e-2), (
        "bf16 path mismatch, max abs diff=%e" % float(jnp.max(jnp.abs(y_bf16 - y_ref))))

    print("KERNEL_OK")
</pallas_src>

<mosaic_0001>
module attributes {stable_mosaic.version = 11 : i64} {
  func.func @_bn_input_proj_kernel(%arg0: i32, %arg1: memref<32x32xf32, #tpu.memory_space<vmem>>, %arg2: memref<1x32xf32, #tpu.memory_space<vmem>>, %arg3: memref<1x32xf32, #tpu.memory_space<vmem>>, %arg4: memref<32x128xf32, #tpu.memory_space<vmem>>, %arg5: memref<1x128xf32, #tpu.memory_space<vmem>>, %arg6: memref<32x128xf32, #tpu.memory_space<vmem>>) attributes {dimension_semantics = [#tpu.dimension_semantics<parallel>], iteration_bounds = array<i64: 1>, scalar_prefetch = 0 : i64, scratch_operands = 0 : i64, tpu.core_type = #tpu.core_type<tc>, window_params = [{transform_indices = @transform_0, window_bounds = array<i64: 32, 32>}, {pipeline_mode = #tpu.pipeline_mode<synchronous>, transform_indices = @transform_1, window_bounds = array<i64: 1, 32>}, {pipeline_mode = #tpu.pipeline_mode<synchronous>, transform_indices = @transform_2, window_bounds = array<i64: 1, 32>}, {pipeline_mode = #tpu.pipeline_mode<synchronous>, transform_indices = @transform_3, window_bounds = array<i64: 32, 128>}, {pipeline_mode = #tpu.pipeline_mode<synchronous>, transform_indices = @transform_4, window_bounds = array<i64: 1, 128>}, {transform_indices = @transform_5, window_bounds = array<i64: 32, 128>}]} {
    %c0 = arith.constant 0 : index
    %c0_0 = arith.constant 0 : index
    %0 = vector.load %arg1[%c0, %c0_0] : memref<32x32xf32, #tpu.memory_space<vmem>>, vector<32x32xf32>
    %c0_1 = arith.constant 0 : index
    %c0_2 = arith.constant 0 : index
    %1 = vector.load %arg2[%c0_1, %c0_2] : memref<1x32xf32, #tpu.memory_space<vmem>>, vector<1x32xf32>
    %2 = vector.broadcast %1 : vector<1x32xf32> to vector<32x32xf32>
    %3 = arith.mulf %0, %2 : vector<32x32xf32>
    %c0_3 = arith.constant 0 : index
    %c0_4 = arith.constant 0 : index
    %4 = vector.load %arg3[%c0_3, %c0_4] : memref<1x32xf32, #tpu.memory_space<vmem>>, vector<1x32xf32>
    %5 = vector.broadcast %4 : vector<1x32xf32> to vector<32x32xf32>
    %6 = arith.addf %3, %5 : vector<32x32xf32>
    %c0_5 = arith.constant 0 : index
    %c0_6 = arith.constant 0 : index
    %7 = vector.load %arg4[%c0_5, %c0_6] : memref<32x128xf32, #tpu.memory_space<vmem>>, vector<32x128xf32>
    %cst = arith.constant dense<0.000000e+00> : vector<32x128xf32>
    %8 = tpu.matmul %6, %7, %cst {dimension_numbers = #tpu.dot_dimension_numbers<[1], [0], [0], [1], [0, 0, 1, 1], [], []>} : vector<32x32xf32>, vector<32x128xf32>, vector<32x128xf32> -> vector<32x128xf32>
    %c0_7 = arith.constant 0 : index
    %c0_8 = arith.constant 0 : index
    %9 = vector.load %arg5[%c0_7, %c0_8] : memref<1x128xf32, #tpu.memory_space<vmem>>, vector<1x128xf32>
    %10 = vector.broadcast %9 : vector<1x128xf32> to vector<32x128xf32>
    %11 = arith.addf %8, %10 : vector<32x128xf32>
    %c0_9 = arith.constant 0 : index
    %c0_10 = arith.constant 0 : index
    %12 = vector.load %arg6[%c0_9, %c0_10] : memref<32x128xf32, #tpu.memory_space<vmem>>, vector<32x128xf32>
    tpu.vector_store %arg6[%c0_9, %c0_10], %11 {strides = array<i32>} : memref<32x128xf32, #tpu.memory_space<vmem>>, vector<32x128xf32>,
    return
  }
  func.func @transform_0(%arg0: i32) -> (i32, i32) {
    %c0_i32 = arith.constant 0 : i32
    %c0_i32_0 = arith.constant 0 : i32
    return %arg0, %c0_i32 : i32, i32
  }
  func.func @transform_1(%arg0: i32) -> (i32, i32) {
    %c0_i32 = arith.constant 0 : i32
    %c0_i32_0 = arith.constant 0 : i32
    %c0_i32_1 = arith.constant 0 : i32
    return %c0_i32, %c0_i32_0 : i32, i32
  }
  func.func @transform_2(%arg0: i32) -> (i32, i32) {
    %c0_i32 = arith.constant 0 : i32
    %c0_i32_0 = arith.constant 0 : i32
    %c0_i32_1 = arith.constant 0 : i32
    return %c0_i32, %c0_i32_0 : i32, i32
  }
  func.func @transform_3(%arg0: i32) -> (i32, i32) {
    %c0_i32 = arith.constant 0 : i32
    %c0_i32_0 = arith.constant 0 : i32
    %c0_i32_1 = arith.constant 0 : i32
    return %c0_i32, %c0_i32_0 : i32, i32
  }
  func.func @transform_4(%arg0: i32) -> (i32, i32) {
    %c0_i32 = arith.constant 0 : i32
    %c0_i32_0 = arith.constant 0 : i32
    %c0_i32_1 = arith.constant 0 : i32
    return %c0_i32, %c0_i32_0 : i32, i32
  }
  func.func @transform_5(%arg0: i32) -> (i32, i32) {
    %c0_i32 = arith.constant 0 : i32
    %c0_i32_0 = arith.constant 0 : i32
    return %arg0, %c0_i32 : i32, i32
  }
}

</mosaic_0001>

<llo_original>
// kernel: tpu_custom_call.1
$region0: #{tpu_custom_call.1}
  #allocation0 [shape = 'u32[]', space=smem, size = 0x4, offset = 0x4, fixed_abs, tag = 'smem constant byte address 0x4 - core index']
  #allocation1 [shape = 'u32[144,128]{1,0:T(1,128)}', space=vmem, size = 0x12000, scoped, tag = 'internal scratch']
  %s0 = inlined_call_operand.hbm [shape: f32[32,32], index: 0, kind: input, shape index: {}]
  %s1 = inlined_call_operand.vmem [shape: f32[1,32], index: 1, kind: input, shape index: {}]
  %s2 = inlined_call_operand.vmem [shape: f32[1,32], index: 2, kind: input, shape index: {}]
  %s3 = inlined_call_operand.hbm [shape: f32[32,128], index: 3, kind: input, shape index: {}]
  %s4 = inlined_call_operand.vmem [shape: f32[1,128], index: 4, kind: input, shape index: {}]
  %s5 = inlined_call_operand.hbm [shape: f32[32,128], index: 5, kind: output, shape index: {}]
  %s6 = sld [smem:[#allocation0]]
  $region38: #{tpu_custom_call.1} parent=0
    _
  %s8 = ssub.s32 1, %s6
  %s9 = scalar_select 0, %s8, %s6
  $region1: #{tpu_custom_call.1} parent=0
    #allocation2 [shape = 'u8[16384]{0}', space=vmem, size = 0x4000, scoped, tag = 'input window, operand 0, single buffered']
    #allocation3 [shape = 's32[1]{0}', space=sflag, size = 0x4, scoped, tag = 'scoped memory for tpu_custom_call.1']
    #allocation4 [shape = 's32[1]{0}', space=sflag, size = 0x4, scoped, tag = 'scoped memory for tpu_custom_call.1']
    #allocation5 [shape = 'u8[16384]{0}', space=vmem, size = 0x4000, scoped, tag = 'input window, operand 3, single buffered']
    #allocation6 [shape = 's32[1]{0}', space=sflag, size = 0x4, scoped, tag = 'scoped memory for tpu_custom_call.1']
    #allocation7 [shape = 'u8[16384]{0}', space=vmem, size = 0x4000, scoped, tag = 'output window, operand 0, single buffered']
    %10 = vsyncpa [#allocation3], 0
    %11 = vsyncpa [#allocation6], 0
    %12 = vsyncpa [#allocation4], 0
    // Predicated region
    $region2: #{tpu_custom_call.1} parent=1 // pred_check
      _
    $region3: #{tpu_custom_call.1} parent=1 // pred_check_branch
      %14 = sbr.rel (0) target = $region5
    $region4: #{tpu_custom_call.1} parent=1 // pred_region
      %s16 = ssub.s32 512, 512
      %17 = vsyncadd [#allocation3], %s16
      %s18 = sshll.u32 [#allocation2], 4
      %s19 = int_to_ptr.vmem [resolvable:$true] %s18
      %24 = dma.hbm_to_vmem [thread:$0]  %s0, 512, %s19, [#allocation3], 128, 128, 8
    $region5: #{tpu_custom_call.1} parent=1 // pred_fallthru
      _
    // Predicated region
    $region6: #{tpu_custom_call.1} parent=1 // pred_check
      _
    $region7: #{tpu_custom_call.1} parent=1 // pred_check_branch
      %26 = sbr.rel (0) target = $region9
    $region8: #{tpu_custom_call.1} parent=1 // pred_region
      _
    $region9: #{tpu_custom_call.1} parent=1 // pred_fallthru
      _
    // Predicated region
    $region10: #{tpu_custom_call.1} parent=1 // pred_check
      _
    $region11: #{tpu_custom_call.1} parent=1 // pred_check_branch
      %28 = sbr.rel (0) target = $region13
    $region12: #{tpu_custom_call.1} parent=1 // pred_region
      _
    $region13: #{tpu_custom_call.1} parent=1 // pred_fallthru
      _
    // Predicated region
    $region14: #{tpu_custom_call.1} parent=1 // pred_check
      _
    $region15: #{tpu_custom_call.1} parent=1 // pred_check_branch
      %30 = sbr.rel (0) target = $region17
    $region16: #{tpu_custom_call.1} parent=1 // pred_region
      %s32 = ssub.s32 512, 512
      %33 = vsyncadd [#allocation6], %s32
      %s34 = sshll.u32 [#allocation5], 4
      %s35 = int_to_ptr.vmem [resolvable:$true] %s34
      %40 = dma.hbm_to_vmem [thread:$0]  %s3, 512, %s35, [#allocation6], 128, 128, 8
    $region17: #{tpu_custom_call.1} parent=1 // pred_fallthru
      _
    // Predicated region
    $region18: #{tpu_custom_call.1} parent=1 // pred_check
      _
    $region19: #{tpu_custom_call.1} parent=1 // pred_check_branch
      %42 = sbr.rel (0) target = $region21
    $region20: #{tpu_custom_call.1} parent=1 // pred_region
      _
    $region21: #{tpu_custom_call.1} parent=1 // pred_fallthru
      _
    // Predicated region
    $region22: #{tpu_custom_call.1} parent=1 // pred_check
      _
    $region23: #{tpu_custom_call.1} parent=1 // pred_check_branch
      %44 = sbr.rel (0) target = $region25
    $region24: #{tpu_custom_call.1} parent=1 // pred_region
      %45 = dma.done [#allocation3], 512
    $region25: #{tpu_custom_call.1} parent=1 // pred_fallthru
      _
    // Predicated region
    $region26: #{tpu_custom_call.1} parent=1 // pred_check
      _
    $region27: #{tpu_custom_call.1} parent=1 // pred_check_branch
      %47 = sbr.rel (0) target = $region29
    $region28: #{tpu_custom_call.1} parent=1 // pred_region
      %48 = dma.done [#allocation6], 512
    $region29: #{tpu_custom_call.1} parent=1 // pred_fallthru
      _
    %v49 = vld [vmem:[#allocation2] sm:$0xff]
    %v50 = vld [vmem:[#allocation2 + $0x8] sm:$0xff]
    %v51 = vld [vmem:[#allocation2 + $0x10] sm:$0xff]
    %v52 = vld [vmem:[#allocation2 + $0x18] sm:$0xff]
    %v53 = vld [vmem:[%s1] sm:$0x1]
    %v55 = vlaneseq
    %v56 = vshrl.u32 %v55, 7
    %v57 = vsub.s32 0, %v56
    %v58 = vrot.slane %v53, %v57
    %v60 = vmul.f32 %v49, %v58
    %v61 = vmul.f32 %v50, %v58
    %v62 = vmul.f32 %v51, %v58
    %v63 = vmul.f32 %v52, %v58
    %v64 = vld [vmem:[%s2] sm:$0x1]
    %v66 = vlaneseq
    %v67 = vshrl.u32 %v66, 7
    %v68 = vsub.s32 0, %v67
    %v69 = vrot.slane %v64, %v68
    %v71 = vadd.f32 %v60, %v69
    %v72 = vadd.f32 %v61, %v69
    %v73 = vadd.f32 %v62, %v69
    %v74 = vadd.f32 %v63, %v69
    %v75 = vld [vmem:[#allocation5] sm:$0xff]
    %v76 = vld [vmem:[#allocation5 + $0x8] sm:$0xff]
    %v77 = vld [vmem:[#allocation5 + $0x10] sm:$0xff]
    %v78 = vld [vmem:[#allocation5 + $0x18] sm:$0xff]
    %v79 = vld [vmem:[%s4] sm:$0x1]
    %v81 = vlaneseq
    %v82 = vshrl.u32 %v81, 7
    %v83 = vsub.s32 0, %v82
    %v84 = vrot.slane %v79, %v83
    %vm86 = vcmask 261120
    %v88 = vsel %vm86, %v71, 0
    %v91 = vsel %vm86, %v72, 0
    %v94 = vsel %vm86, %v73, 0
    %v97 = vsel %vm86, %v74, 0
    %99 = vmatprep.subr.mxu0 0.0
    %100 = vmatpush1.msra.mxu0 %v75
    %101 = vmatprep.subr.mxu0 0.0
    %102 = vmatpush1.msra.mxu0 %v76
    %103 = vmatprep.subr.mxu0 0.0
    %104 = vmatpush1.msra.mxu0 %v77
    %105 = vmatprep.subr.mxu0 0.0
    %106 = vmatpush1.msra.mxu0 %v78
    %107 = vmatprep.subr.mxu0 0.0
    %108 = vmatpush1.msra.mxu0 0.0
    %109 = vmatprep.subr.mxu0 0.0
    %110 = vmatpush1.msra.mxu0 0.0
    %111 = vmatprep.subr.mxu0 0.0
    %112 = vmatpush1.msra.mxu0 0.0
    %113 = vmatprep.subr.mxu0 0.0
    %114 = vmatpush1.msra.mxu0 0.0
    %115 = vmatprep.subr.mxu0 0.0
    %116 = vmatpush1.msra.mxu0 0.0
    %117 = vmatprep.subr.mxu0 0.0
    %118 = vmatpush1.msra.mxu0 0.0
    %119 = vmatprep.subr.mxu0 0.0
    %120 = vmatpush1.msra.mxu0 0.0
    %121 = vmatprep.subr.mxu0 0.0
    %122 = vmatpush1.msra.mxu0 0.0
    %123 = vmatprep.subr.mxu0 0.0
    %124 = vmatpush1.msra.mxu0 0.0
    %125 = vmatprep.subr.mxu0 0.0
    %126 = vmatpush1.msra.mxu0 0.0
    %127 = vmatprep.subr.mxu0 0.0
    %128 = vmatpush1.msra.mxu0 0.0
    %129 = vmatprep.subr.mxu0 0.0
    %130 = vmatpush1.msra.mxu0 0.0
    %131 = vmatprep.subr.mxu0 0.0
    %132 = vmatpush1.msra.mxu0 0.0
    %133 = vmatprep.subr.mxu0 0.0
    %134 = vmatpush1.msra.mxu0 0.0
    %135 = vmatprep.subr.mxu0 0.0
    %136 = vmatpush1.msra.mxu0 0.0
    %137 = vmatprep.subr.mxu0 0.0
    %138 = vmatpush1.msra.mxu0 0.0
    %139 = vmatprep.subr.mxu0 0.0
    %140 = vmatpush1.msra.mxu0 0.0
    %141 = vmatprep.subr.mxu0 0.0
    %142 = vmatpush1.msra.mxu0 0.0
    %143 = vmatprep.subr.mxu0 0.0
    %144 = vmatpush1.msra.mxu0 0.0
    %145 = vmatprep.subr.mxu0 0.0
    %146 = vmatpush1.msra.mxu0 0.0
    %147 = vmatprep.subr.mxu0 0.0
    %148 = vmatpush1.msra.mxu0 0.0
    %149 = vmatprep.subr.mxu0 0.0
    %150 = vmatpush1.msra.mxu0 0.0
    %151 = vmatprep.subr.mxu0 0.0
    %152 = vmatpush1.msra.mxu0 0.0
    %153 = vmatprep.subr.mxu0 0.0
    %154 = vmatpush1.msra.mxu0 0.0
    %155 = vmatprep.subr.mxu0 0.0
    %156 = vmatpush1.msra.mxu0 0.0
    %157 = vmatprep.subr.mxu0 0.0
    %158 = vmatpush1.msra.mxu0 0.0
    %159 = vmatprep.subr.mxu0 0.0
    %160 = vmatpush1.msra.mxu0 0.0
    %161 = vmatprep.subr.mxu0 0.0
    %162 = vmatpush1.msra.mxu0 0.0
    %163 = vmatprep.mubr.f32.mxu0 0.0
    %164 = vmatmul.mubr.f32.gmra.mrb[0].mxu0 %v88
    %v165 = vpop.f32.mrb[0].mxu0
    %v166 = vadd.f32 %v84, %v165
    %v167 = vpop.f32.mrb[0].mxu0
    %168 = vmatprep.mubr.f32.mxu0 0.0
    %169 = vmatmul.mubr.f32.gmra.mrb[0].mxu0 %v91
    %v170 = vpop.f32.mrb[0].mxu0
    %v171 = vadd.f32 %v84, %v170
    %v172 = vpop.f32.mrb[0].mxu0
    %173 = vmatprep.mubr.f32.mxu0 0.0
    %174 = vmatmul.mubr.f32.gmra.mrb[0].mxu0 %v94
    %v175 = vpop.f32.mrb[0].mxu0
    %v176 = vadd.f32 %v84, %v175
    %v177 = vpop.f32.mrb[0].mxu0
    %178 = vmatprep.mubr.f32.mxu0 0.0
    %179 = vmatmul.mubr.f32.gmra.mrb[0].mxu0 %v97
    %v180 = vpop.f32.mrb[0].mxu0
    %v181 = vadd.f32 %v84, %v180
    %v182 = vpop.f32.mrb[0].mxu0
    %183 = vdwg.mxu0
    %184 = vst [vmem:[#allocation7] sm:$0xff] %v166
    %185 = vst [vmem:[#allocation7 + $0x8] sm:$0xff] %v171
    %186 = vst [vmem:[#allocation7 + $0x10] sm:$0xff] %v176
    %187 = vst [vmem:[#allocation7 + $0x18] sm:$0xff] %v181
    // Predicated region
    $region30: #{tpu_custom_call.1} parent=1 // pred_check
      _
    $region31: #{tpu_custom_call.1} parent=1 // pred_check_branch
      %189 = sbr.rel (0) target = $region33
    $region32: #{tpu_custom_call.1} parent=1 // pred_region
      %s191 = ssub.s32 512, 512
      %192 = vsyncadd [#allocation4], %s191
      %s193 = sshll.u32 [#allocation7], 4
      %s194 = int_to_ptr.vmem [resolvable:$true] %s193
      %199 = dma.vmem_to_hbm [thread:$0]  %s194, 512, %s5, [#allocation4], 128, 128, 8
    $region33: #{tpu_custom_call.1} parent=1 // pred_fallthru
      _
    // Predicated region
    $region34: #{tpu_custom_call.1} parent=1 // pred_check
      _
    $region35: #{tpu_custom_call.1} parent=1 // pred_check_branch
      %201 = sbr.rel (0) target = $region37
    $region36: #{tpu_custom_call.1} parent=1 // pred_region
      %202 = dma.done [#allocation4], 512
    $region37: #{tpu_custom_call.1} parent=1 // pred_fallthru
      _
    %203 = vsyncpa [#allocation3], 1
    %204 = vsyncpa [#allocation6], 1
    %205 = vsyncpa [#allocation4], 1

</llo_original>
